<compile_context>
chip_gen: v7x
topology: tpu7x:2x2x1
jax: 0.10.0
libtpu: 0.0.40
codegen_flags: <defaults>
</compile_context>

<pallas_src>
import functools

import jax
import jax.numpy as jnp
from jax.experimental import pallas as pl
from jax.experimental.pallas import tpu as pltpu


def _round_up(x, m):
    return (x + m - 1) // m * m


def genre_decoder_kernel(xt_ref, wt_ref, b_ref, o_ref):
    # logits_T: (18, TB) = (18, 6) @ (6, TB) + (18, 1)   (f32 accumulate on MXU)
    logits = jnp.dot(wt_ref[...], xt_ref[...],
                     preferred_element_type=jnp.float32) + b_ref[...]
    # Numerically-stable softmax over the feature axis (axis 0 in this
    # transposed layout == PyTorch dim=1 on the (B, 18) output).
    m = jnp.max(logits, axis=0, keepdims=True)
    e = jnp.exp(logits - m)
    denom = jnp.sum(e, axis=0, keepdims=True)
    # Exact division: EUP/VPU have huge slack at the HBM roofline, and this
    # keeps row sums at 1 to ~1e-6 (approx reciprocal cost ~1e-3 accuracy).
    o_ref[...] = (e / denom).astype(o_ref.dtype)


@functools.partial(jax.jit,
                   static_argnames=("tb", "out_dtype", "transposed_io"))
def genre_decoder(x, w, b, *, tb=16384, out_dtype=jnp.float32,
                  transposed_io=False):
    """Softmax(x @ w + b, axis=1).

    Default layout (PyTorch-compatible):
        x: (B, 6) f32, w: (6, 18) f32 (= torch weight.T), b: (18,) -> (B, 18)
    transposed_io=True (fusion-friendly, avoids wrapper transpose passes):
        x: (6, B) -> (18, B)
    """
    in_f, out_f = w.shape
    if transposed_io:
        B = x.shape[1]
        xt_full = x
    else:
        B = x.shape[0]
        xt_full = x.T                                    # (6, B)

    # Pad batch up to a lane-friendly multiple (>= 128).
    b_pad = _round_up(max(B, 1), 128)

    # Tile sizing: multiple of 128, no bigger than the padded batch, and if
    # the batch allows >= 2 tiles keep the grid at >= 2 steps so the
    # "parallel" axis can split across v7x's two TensorCores.
    tb = max(128, (tb // 128) * 128)
    tb = min(tb, b_pad)
    if b_pad >= 2 * 128:
        tb = min(tb, max(128, (b_pad // 2 // 128) * 128))
    b_pad = _round_up(b_pad, tb)

    # Lane-dense layouts: batch on the last (128-lane) axis.
    xt = jnp.pad(xt_full, ((0, 0), (0, b_pad - B)))      # (6, B_pad), zero pad
    wt = w.T                                             # (18, 6)
    bt = b.reshape(out_f, 1).astype(jnp.float32)         # (18, 1)

    out_bytes = jnp.dtype(out_dtype).itemsize
    grid = (b_pad // tb,)
    out_t = pl.pallas_call(
        genre_decoder_kernel,
        out_shape=jax.ShapeDtypeStruct((out_f, b_pad), out_dtype),
        grid=grid,
        in_specs=[
            pl.BlockSpec((in_f, tb), lambda i: (0, i)),      # x_T batch tile
            pl.BlockSpec((out_f, in_f), lambda i: (0, 0)),   # full weight
            pl.BlockSpec((out_f, 1), lambda i: (0, 0)),      # full bias
        ],
        out_specs=pl.BlockSpec((out_f, tb), lambda i: (0, i)),
        compiler_params=pltpu.CompilerParams(
            dimension_semantics=("parallel",),
            # Headroom for double-buffered tiles + f32 intermediates even on
            # v7x (64 MiB physical / 32 MiB scoped default).
            vmem_limit_bytes=48 << 20,
        ),
        cost_estimate=pl.CostEstimate(
            flops=2 * b_pad * in_f * out_f,
            transcendentals=b_pad * out_f,
            bytes_accessed=in_f * b_pad * 4 + out_f * b_pad * out_bytes
            + (in_f * out_f + out_f) * 4,
        ),
    )(xt, wt, bt)

    if transposed_io:
        return out_t[:, :B]                # (18, B)
    # Drop batch padding, return the PyTorch (B, 18) layout.
    return out_t[:, :B].T


def init_params(key):
    """Deterministic init mirroring nn.Linear(6, 18) default U[-1/sqrt(6), 1/sqrt(6)]."""
    in_features, out_features = 6, 18
    kw, kb = jax.random.split(key)
    bound = 1.0 / jnp.sqrt(jnp.float32(in_features))
    # stored as (in, out) so the math is x @ w (kernel uses the transposed view)
    w = jax.random.uniform(kw, (in_features, out_features), jnp.float32,
                           minval=-bound, maxval=bound)
    b = jax.random.uniform(kb, (out_features,), jnp.float32,
                           minval=-bound, maxval=bound)
    return w, b


if __name__ == "__main__":
    key = jax.random.PRNGKey(0)
    k_x, k_p, k_x2 = jax.random.split(key, 3)

    w, b = init_params(k_p)

    def ref_fn(xv):
        return jax.nn.softmax(xv @ w + b[None, :], axis=1)

    # Small batch (single grid step).
    B = 8
    x = jax.random.normal(k_x, (B, 6), dtype=jnp.float32)
    out = jax.block_until_ready(genre_decoder(x, w, b))
    assert out.shape == (B, 18)
    assert jnp.allclose(out, ref_fn(x), atol=1e-5, rtol=1e-5)
    assert jnp.allclose(jnp.sum(out, axis=1), 1.0, atol=1e-5)

    # Ragged batch exercising multiple grid steps + zero-padded tail tile.
    B2 = 300
    x2 = jax.random.normal(k_x2, (B2, 6), dtype=jnp.float32)
    out2 = jax.block_until_ready(genre_decoder(x2, w, b))
    assert out2.shape == (B2, 18)
    assert jnp.allclose(out2, ref_fn(x2), atol=1e-5, rtol=1e-5)
    assert jnp.allclose(jnp.sum(out2, axis=1), 1.0, atol=1e-5)

    # Transposed-IO path (fusion-friendly, no wrapper transpose passes).
    out3 = jax.block_until_ready(
        genre_decoder(x2.T, w, b, transposed_io=True))
    assert out3.shape == (18, B2)
    assert jnp.allclose(out3.T, ref_fn(x2), atol=1e-5, rtol=1e-5)

    print("KERNEL_OK")
</pallas_src>

<mosaic_0001>
module attributes {stable_mosaic.version = 11 : i64} {
  func.func @genre_decoder_kernel(%arg0: i32, %arg1: memref<6x128xf32, #tpu.memory_space<vmem>>, %arg2: memref<18x6xf32, #tpu.memory_space<vmem>>, %arg3: memref<18x1xf32, #tpu.memory_space<vmem>>, %arg4: memref<18x128xf32, #tpu.memory_space<vmem>>) attributes {dimension_semantics = [#tpu.dimension_semantics<parallel>], iteration_bounds = array<i64: 1>, scalar_prefetch = 0 : i64, scratch_operands = 0 : i64, tpu.core_type = #tpu.core_type<tc>, window_params = [{transform_indices = @transform_0, window_bounds = array<i64: 6, 128>}, {pipeline_mode = #tpu.pipeline_mode<synchronous>, transform_indices = @transform_1, window_bounds = array<i64: 18, 6>}, {pipeline_mode = #tpu.pipeline_mode<synchronous>, transform_indices = @transform_2, window_bounds = array<i64: 18, 1>}, {transform_indices = @transform_3, window_bounds = array<i64: 18, 128>}]} {
    %c0 = arith.constant 0 : index
    %c0_0 = arith.constant 0 : index
    %0 = vector.load %arg2[%c0, %c0_0] : memref<18x6xf32, #tpu.memory_space<vmem>>, vector<18x6xf32>
    %c0_1 = arith.constant 0 : index
    %c0_2 = arith.constant 0 : index
    %1 = vector.load %arg1[%c0_1, %c0_2] : memref<6x128xf32, #tpu.memory_space<vmem>>, vector<6x128xf32>
    %cst = arith.constant dense<0.000000e+00> : vector<18x128xf32>
    %2 = tpu.matmul %0, %1, %cst {dimension_numbers = #tpu.dot_dimension_numbers<[1], [0], [0], [1], [0, 0, 1, 1], [], []>} : vector<18x6xf32>, vector<6x128xf32>, vector<18x128xf32> -> vector<18x128xf32>
    %c0_3 = arith.constant 0 : index
    %c0_4 = arith.constant 0 : index
    %3 = vector.load %arg3[%c0_3, %c0_4] : memref<18x1xf32, #tpu.memory_space<vmem>>, vector<18x1xf32>
    %4 = vector.broadcast %3 : vector<18x1xf32> to vector<18x128xf32>
    %5 = arith.addf %2, %4 : vector<18x128xf32>
    %cst_5 = arith.constant dense<0xFF800000> : vector<128xf32>
    %6 = vector.multi_reduction <maximumf>, %5, %cst_5 [0] : vector<18x128xf32> to vector<128xf32>
    %7 = vector.shape_cast %6 : vector<128xf32> to vector<1x128xf32>
    %8 = vector.broadcast %7 : vector<1x128xf32> to vector<18x128xf32>
    %9 = arith.subf %5, %8 : vector<18x128xf32>
    %10 = math.exp %9 : vector<18x128xf32>
    %cst_6 = arith.constant dense<0.000000e+00> : vector<128xf32>
    %11 = vector.multi_reduction <add>, %10, %cst_6 [0] : vector<18x128xf32> to vector<128xf32>
    %12 = vector.shape_cast %11 : vector<128xf32> to vector<1x128xf32>
    %13 = vector.broadcast %12 : vector<1x128xf32> to vector<18x128xf32>
    %14 = arith.divf %10, %13 : vector<18x128xf32>
    %c0_7 = arith.constant 0 : index
    %c0_8 = arith.constant 0 : index
    %15 = vector.load %arg4[%c0_7, %c0_8] : memref<18x128xf32, #tpu.memory_space<vmem>>, vector<18x128xf32>
    tpu.vector_store %arg4[%c0_7, %c0_8], %14 {strides = array<i32>} : memref<18x128xf32, #tpu.memory_space<vmem>>, vector<18x128xf32>,
    return
  }
  func.func @transform_0(%arg0: i32) -> (i32, i32) {
    %c0_i32 = arith.constant 0 : i32
    %c0_i32_0 = arith.constant 0 : i32
    return %c0_i32, %arg0 : i32, i32
  }
  func.func @transform_1(%arg0: i32) -> (i32, i32) {
    %c0_i32 = arith.constant 0 : i32
    %c0_i32_0 = arith.constant 0 : i32
    %c0_i32_1 = arith.constant 0 : i32
    return %c0_i32, %c0_i32_0 : i32, i32
  }
  func.func @transform_2(%arg0: i32) -> (i32, i32) {
    %c0_i32 = arith.constant 0 : i32
    %c0_i32_0 = arith.constant 0 : i32
    %c0_i32_1 = arith.constant 0 : i32
    return %c0_i32, %c0_i32_0 : i32, i32
  }
  func.func @transform_3(%arg0: i32) -> (i32, i32) {
    %c0_i32 = arith.constant 0 : i32
    %c0_i32_0 = arith.constant 0 : i32
    return %c0_i32, %arg0 : i32, i32
  }
}

</mosaic_0001>

<llo_original>
// kernel: genre_decoder.1
$region0: #{genre_decoder.1}
  #allocation0 [shape = 'u32[]', space=smem, size = 0x4, offset = 0x4, fixed_abs, tag = 'smem constant byte address 0x4 - core index']
  #allocation1 [shape = 'u32[144,128]{1,0:T(1,128)}', space=vmem, size = 0x12000, scoped, tag = 'internal scratch']
  %s0 = inlined_call_operand.vmem [shape: f32[6,128], index: 0, kind: input, shape index: {}]
  %s1 = inlined_call_operand.vmem [shape: f32[18,6], index: 1, kind: input, shape index: {}]
  %s2 = inlined_call_operand.vmem [shape: f32[18,1], index: 2, kind: input, shape index: {}]
  %s3 = inlined_call_operand.vmem [shape: f32[18,128], index: 3, kind: output, shape index: {}]
  %s4 = sld [smem:[#allocation0]]
  $region22: #{genre_decoder.1} parent=0
    _
  %s6 = ssub.s32 1, %s4
  %s7 = scalar_select 0, %s6, %s4
  // Predicated region
  $region2: #{genre_decoder.1} parent=0 // pred_check
    _
  $region3: #{genre_decoder.1} parent=0 // pred_check_branch
    %9 = sbr.rel (0) target = $region5
  $region4: #{genre_decoder.1} parent=0 // pred_region
    _
  $region5: #{genre_decoder.1} parent=0 // pred_fallthru
    _
  // Predicated region
  $region6: #{genre_decoder.1} parent=0 // pred_check
    _
  $region7: #{genre_decoder.1} parent=0 // pred_check_branch
    %11 = sbr.rel (0) target = $region9
  $region8: #{genre_decoder.1} parent=0 // pred_region
    _
  $region9: #{genre_decoder.1} parent=0 // pred_fallthru
    _
  // Predicated region
  $region10: #{genre_decoder.1} parent=0 // pred_check
    _
  $region11: #{genre_decoder.1} parent=0 // pred_check_branch
    %13 = sbr.rel (0) target = $region13
  $region12: #{genre_decoder.1} parent=0 // pred_region
    _
  $region13: #{genre_decoder.1} parent=0 // pred_fallthru
    _
  %v14 = vld [vmem:[%s1] sm:$0xff]
  %v15 = vld [vmem:[%s1 + $0x8] sm:$0xff]
  %v16 = vld [vmem:[%s1 + $0x10] sm:$0x3]
  %v17 = vld [vmem:[%s0] sm:$0x3f]
  %v18 = vld [vmem:[%s2] sm:$0xff]
  %v19 = vld [vmem:[%s2 + $0x8] sm:$0xff]
  %v20 = vld [vmem:[%s2 + $0x10] sm:$0x3]
  %22 = vset.pattern.permute.xlu0 0
  %23 = vperm.xlu0 %22, %v18
  %v24 = vpop.permute.xlu0 %23
  %27 = vset.pattern.permute.xlu0 0
  %28 = vperm.xlu0 %27, %v19
  %v29 = vpop.permute.xlu0 %28
  %32 = vset.pattern.permute.xlu0 0
  %33 = vperm.xlu0 %32, %v20
  %v34 = vpop.permute.xlu0 %33
  %vm36 = vcmask 48128
  %v38 = vsel %vm36, %v14, 0
  %v41 = vsel %vm36, %v15, 0
  %v44 = vsel %vm36, %v16, 0
  %vm46 = vcmask 1045504
  %v48 = vsel %vm46, %v17, 0
  %50 = vmatprep.subr.mxu0 0.0
  %51 = vmatpush1.msra.mxu0 %v48
  %52 = vmatprep.subr.mxu0 0.0
  %53 = vmatpush1.msra.mxu0 0.0
  %54 = vmatprep.subr.mxu0 0.0
  %55 = vmatpush1.msra.mxu0 0.0
  %56 = vmatprep.subr.mxu0 0.0
  %57 = vmatpush1.msra.mxu0 0.0
  %58 = vmatprep.subr.mxu0 0.0
  %59 = vmatpush1.msra.mxu0 0.0
  %60 = vmatprep.subr.mxu0 0.0
  %61 = vmatpush1.msra.mxu0 0.0
  %62 = vmatprep.subr.mxu0 0.0
  %63 = vmatpush1.msra.mxu0 0.0
  %64 = vmatprep.subr.mxu0 0.0
  %65 = vmatpush1.msra.mxu0 0.0
  %66 = vmatprep.subr.mxu0 0.0
  %67 = vmatpush1.msra.mxu0 0.0
  %68 = vmatprep.subr.mxu0 0.0
  %69 = vmatpush1.msra.mxu0 0.0
  %70 = vmatprep.subr.mxu0 0.0
  %71 = vmatpush1.msra.mxu0 0.0
  %72 = vmatprep.subr.mxu0 0.0
  %73 = vmatpush1.msra.mxu0 0.0
  %74 = vmatprep.subr.mxu0 0.0
  %75 = vmatpush1.msra.mxu0 0.0
  %76 = vmatprep.subr.mxu0 0.0
  %77 = vmatpush1.msra.mxu0 0.0
  %78 = vmatprep.subr.mxu0 0.0
  %79 = vmatpush1.msra.mxu0 0.0
  %80 = vmatprep.subr.mxu0 0.0
  %81 = vmatpush1.msra.mxu0 0.0
  %82 = vmatprep.subr.mxu0 0.0
  %83 = vmatpush1.msra.mxu0 0.0
  %84 = vmatprep.subr.mxu0 0.0
  %85 = vmatpush1.msra.mxu0 0.0
  %86 = vmatprep.subr.mxu0 0.0
  %87 = vmatpush1.msra.mxu0 0.0
  %88 = vmatprep.subr.mxu0 0.0
  %89 = vmatpush1.msra.mxu0 0.0
  %90 = vmatprep.subr.mxu0 0.0
  %91 = vmatpush1.msra.mxu0 0.0
  %92 = vmatprep.subr.mxu0 0.0
  %93 = vmatpush1.msra.mxu0 0.0
  %94 = vmatprep.subr.mxu0 0.0
  %95 = vmatpush1.msra.mxu0 0.0
  %96 = vmatprep.subr.mxu0 0.0
  %97 = vmatpush1.msra.mxu0 0.0
  %98 = vmatprep.subr.mxu0 0.0
  %99 = vmatpush1.msra.mxu0 0.0
  %100 = vmatprep.subr.mxu0 0.0
  %101 = vmatpush1.msra.mxu0 0.0
  %102 = vmatprep.subr.mxu0 0.0
  %103 = vmatpush1.msra.mxu0 0.0
  %104 = vmatprep.subr.mxu0 0.0
  %105 = vmatpush1.msra.mxu0 0.0
  %106 = vmatprep.subr.mxu0 0.0
  %107 = vmatpush1.msra.mxu0 0.0
  %108 = vmatprep.subr.mxu0 0.0
  %109 = vmatpush1.msra.mxu0 0.0
  %110 = vmatprep.subr.mxu0 0.0
  %111 = vmatpush1.msra.mxu0 0.0
  %112 = vmatprep.subr.mxu0 0.0
  %113 = vmatpush1.msra.mxu0 0.0
  %114 = vmatprep.mubr.f32.mxu0 0.0
  %115 = vmatmul.mubr.f32.gmra.mrb[0].mxu0 %v38
  %v116 = vpop.f32.mrb[0].mxu0
  %v117 = vadd.f32 %v24, %v116
  %v118 = vpop.f32.mrb[0].mxu0
  %119 = vmatprep.mubr.f32.mxu0 0.0
  %120 = vmatmul.mubr.f32.gmra.mrb[0].mxu0 %v41
  %v121 = vpop.f32.mrb[0].mxu0
  %v122 = vadd.f32 %v29, %v121
  %v123 = vpop.f32.mrb[0].mxu0
  %124 = vmatprep.mubr.f32.mxu0 0.0
  %125 = vmatmul.mubr.f32.gmra.mrb[0].mxu0 %v44
  %v126 = vpop.f32.mrb[0].mxu0
  %v127 = vadd.f32 %v34, %v126
  %v128 = vpop.f32.mrb[0].mxu0
  %129 = vdwg.mxu0
  %vm130 = vcmask 1041408
  %v131 = vsel %vm130, %v127, -inf
  %v132 = vmax.f32 %v117, %v122
  %v133 = vmax.f32 %v132, %v131
  %v134 = vrot.slane %v133, 4
  %v135 = vmax.f32 %v133, %v134
  %v136 = vrot.slane %v135, 2
  %v137 = vmax.f32 %v135, %v136
  %v138 = vrot.slane %v137, 1
  %v139 = vmax.f32 %v137, %v138
  %v140 = vsub.f32 %v117, %v139
  %v141 = vsub.f32 %v122, %v139
  %v142 = vsub.f32 %v127, %v139
  %v143 = vmul.f32 %v140, 1.442695
  %v144 = vpow.pop %v143
  %v145 = vmul.f32 %v141, 1.442695
  %v146 = vpow.pop %v145
  %v147 = vmul.f32 %v142, 1.442695
  %v148 = vpow.pop %v147
  %v149 = vadd.f32 %v144, %v146
  %v150 = vsel %vm130, %v148, 0.0
  %v151 = vadd.f32 %v149, %v150
  %v152 = vrot.slane %v151, 4
  %v153 = vadd.f32 %v151, %v152
  %v154 = vrot.slane %v153, 2
  %v155 = vadd.f32 %v153, %v154
  %v156 = vrot.slane %v155, 1
  %v157 = vadd.f32 %v155, %v156
  %v158 = vrcp.pop %v157
  %v159 = vmul.f32 %v144, %v158
  %v160 = vmul.f32 %v146, %v158
  %v161 = vmul.f32 %v148, %v158
  %162 = vst [vmem:[%s3] sm:$0xff] %v159
  %163 = vst [vmem:[%s3 + $0x8] sm:$0xff] %v160
  %164 = vst [vmem:[%s3 + $0x10] sm:$0x3] %v161
  // Predicated region
  $region14: #{genre_decoder.1} parent=0 // pred_check
    _
  $region15: #{genre_decoder.1} parent=0 // pred_check_branch
    %166 = sbr.rel (0) target = $region17
  $region16: #{genre_decoder.1} parent=0 // pred_region
    _
  $region17: #{genre_decoder.1} parent=0 // pred_fallthru
    _
  // Predicated region
  $region18: #{genre_decoder.1} parent=0 // pred_check
    _
  $region19: #{genre_decoder.1} parent=0 // pred_check_branch
    %168 = sbr.rel (0) target = $region21
  $region20: #{genre_decoder.1} parent=0 // pred_region
    _
  $region21: #{genre_decoder.1} parent=0 // pred_fallthru
    _

</llo_original>
